<compile_context>
chip_gen: v5e
topology: v5e:2x2
jax: 0.10.0
libtpu: 0.0.40
codegen_flags: <defaults>
</compile_context>

<pallas_src>
import jax
import jax.numpy as jnp
from jax.experimental import pallas as pl
from jax.experimental.pallas import tpu as pltpu


def _copy_kernel(x_ref, o_ref):
    # Input and output blocks have identical shapes and identical block
    # indices; Pallas masks the out-of-bounds tail of the last row/column
    # block, so a whole-block copy is exactly the kept prefix.
    o_ref[...] = x_ref[...]


def _round_up(x: int, k: int) -> int:
    return ((x + k - 1) // k) * k


def _choose_blocks(m: int, l_out: int, itemsize: int, sublane: int,
                   budget_bytes: int):
    """Pick (bm, bc): row/column block sizes.

    bc is a multiple of 128 lanes (layout rule) and bm a multiple of the
    dtype's sublane count; both are sized so one block stays within
    ~budget_bytes.  Partial last blocks are handled by the cdiv grid + Pallas
    masking, so no divisibility of m / l_out is required.
    """
    # Column block: at least 128 lanes, at most the (rounded-up) full width,
    # capped so that a minimum-height (sublane-row) block still fits budget.
    bc_full = _round_up(l_out, 128)
    max_bc = max(128, (budget_bytes // (sublane * itemsize)) // 128 * 128)
    bc = min(bc_full, max_bc)

    # Row block: fill the remaining budget, rounded to the sublane count.
    row_bytes = bc * itemsize
    bm = max(sublane, (budget_bytes // row_bytes) // sublane * sublane)
    bm = min(bm, _round_up(m, sublane))

    # v7x has 2 TensorCores: avoid a single grid step for mid/large tensors so
    # the "parallel" row axis gives both cores work (neutral on v5e/v6e).
    if pl.cdiv(m, bm) < 2 and m > sublane:
        bm = max(sublane, _round_up(pl.cdiv(m, 2), sublane))

    return bm, bc


def chomp_t(x: jax.Array, chomp: int, *, budget_bytes: int = 2 << 20) -> jax.Array:
    """Pallas equivalent of Chomp_T(chomp).forward(x) for x of shape (N, C, T, F)."""
    n, c, t, f = x.shape
    # PyTorch `x[:, :, 0:-chomp_t, :]` with chomp_t == 0 would be an *empty*
    # slice (0:-0 == 0:0), a degenerate case we do not support.
    assert 0 < chomp < t, "chomp_t must satisfy 0 < chomp_t < T"
    t_out = t - chomp

    m = n * c
    l_in = t * f
    l_out = t_out * f
    x2 = x.reshape(m, l_in)

    itemsize = jnp.dtype(x.dtype).itemsize
    sublane = {1: 32, 2: 16, 4: 8}.get(itemsize, 8)

    bm, bc = _choose_blocks(m, l_out, itemsize, sublane, budget_bytes)
    grid = (pl.cdiv(m, bm), pl.cdiv(l_out, bc))

    cost = pl.CostEstimate(
        flops=0,
        transcendentals=0,
        bytes_accessed=2 * m * l_out * itemsize,   # read kept prefix + write it
    )

    out2 = pl.pallas_call(
        _copy_kernel,
        out_shape=jax.ShapeDtypeStruct((m, l_out), x.dtype),
        grid=grid,
        in_specs=[pl.BlockSpec((bm, bc), lambda i, j: (i, j))],
        out_specs=pl.BlockSpec((bm, bc), lambda i, j: (i, j)),
        compiler_params=pltpu.CompilerParams(
            # Both axes are independent copies -> shard freely across TCs.
            dimension_semantics=("parallel", "parallel"),
        ),
        cost_estimate=cost,
    )(x2)

    return out2.reshape(n, c, t_out, f)


if __name__ == "__main__":
    key = jax.random.PRNGKey(0)

    # Case 1 (primary, matches the module's usage): small NCHW-like tensor,
    # t_out*F = 224 (not a multiple of 128) -> single masked column block.
    N, C, T, F = 2, 4, 16, 16
    CHOMP = 2
    x = jax.random.normal(key, (N, C, T, F), dtype=jnp.float32)
    out = jax.block_until_ready(chomp_t(x, CHOMP))
    ref = x[:, :, 0:-CHOMP, :]
    assert out.shape == (N, C, T - CHOMP, F), out.shape
    assert out.dtype == x.dtype
    assert jnp.array_equal(out, ref), "mismatch (case 1)"

    # Case 2: non-multiple row count -> partial last row block via cdiv grid.
    N2, C2, T2, F2, CH2 = 2, 6, 20, 128, 3
    x2 = jax.random.normal(jax.random.PRNGKey(0), (N2, C2, T2, F2), dtype=jnp.float32)
    out2 = jax.block_until_ready(chomp_t(x2, CH2))
    ref2 = x2[:, :, 0:-CH2, :]
    assert out2.shape == (N2, C2, T2 - CH2, F2), out2.shape
    assert jnp.array_equal(out2, ref2), "mismatch (case 2)"

    # Case 3: force column blocking with a small budget so the last column
    # block is masked and its input tail overlaps the chomped region.
    out3 = jax.block_until_ready(chomp_t(x2, CH2, budget_bytes=64 * 1024))
    assert jnp.array_equal(out3, ref2), "mismatch (case 3, column-blocked)"

    # Case 4: bf16 (sublane packing = 16).
    xb = jax.random.normal(key, (N, C, T, F), dtype=jnp.float32).astype(jnp.bfloat16)
    outb = jax.block_until_ready(chomp_t(xb, CHOMP))
    assert jnp.array_equal(outb, xb[:, :, 0:-CHOMP, :]), "mismatch (case 4, bf16)"

    print("KERNEL_OK")
</pallas_src>

<mosaic_0001>
module attributes {stable_mosaic.version = 11 : i64} {
  func.func @_copy_kernel(%arg0: i32, %arg1: i32, %arg2: memref<8x256xf32, #tpu.memory_space<vmem>>, %arg3: memref<8x256xf32, #tpu.memory_space<vmem>>) attributes {dimension_semantics = [#tpu.dimension_semantics<parallel>, #tpu.dimension_semantics<parallel>], iteration_bounds = array<i64: 1, 1>, scalar_prefetch = 0 : i64, scratch_operands = 0 : i64, tpu.core_type = #tpu.core_type<tc>, window_params = [{transform_indices = @transform_0, window_bounds = array<i64: 8, 256>}, {transform_indices = @transform_1, window_bounds = array<i64: 8, 256>}]} {
    %c0 = arith.constant 0 : index
    %c0_0 = arith.constant 0 : index
    %0 = vector.load %arg2[%c0, %c0_0] : memref<8x256xf32, #tpu.memory_space<vmem>>, vector<8x256xf32>
    %c0_1 = arith.constant 0 : index
    %c0_2 = arith.constant 0 : index
    %1 = vector.load %arg3[%c0_1, %c0_2] : memref<8x256xf32, #tpu.memory_space<vmem>>, vector<8x256xf32>
    tpu.vector_store %arg3[%c0_1, %c0_2], %0 {strides = array<i32>} : memref<8x256xf32, #tpu.memory_space<vmem>>, vector<8x256xf32>,
    return
  }
  func.func @transform_0(%arg0: i32, %arg1: i32) -> (i32, i32) {
    %c0_i32 = arith.constant 0 : i32
    return %arg0, %arg1 : i32, i32
  }
  func.func @transform_1(%arg0: i32, %arg1: i32) -> (i32, i32) {
    %c0_i32 = arith.constant 0 : i32
    return %arg0, %arg1 : i32, i32
  }
}

</mosaic_0001>

<llo_original>
// kernel: tpu_custom_call.1
$region0: #{tpu_custom_call.1}
  #allocation0 [shape = 'u32[]', space=smem, size = 0x4, offset = 0x4, fixed_abs, tag = 'smem constant byte address 0x4 - core index']
  #allocation1 [shape = 'u32[72,128]{1,0:T(1,128)}', space=vmem, size = 0x9000, scoped, tag = 'internal scratch']
  %s0 = inlined_call_operand.hbm [shape: f32[8,256], index: 0, kind: input, shape index: {}]
  %s1 = inlined_call_operand.hbm [shape: f32[8,224], index: 1, kind: output, shape index: {}]
  %s2 = sld [smem:[#allocation0]]
  $region18: #{tpu_custom_call.1} parent=0
    _
  %s4 = ssub.s32 1, %s2
  %s5 = scalar_select 0, %s4, %s2
  $region1: #{tpu_custom_call.1} parent=0
    #allocation2 [shape = 'u8[8192]{0}', space=vmem, size = 0x2000, scoped, tag = 'input window, operand 0, single buffered']
    #allocation3 [shape = 's32[1]{0}', space=sflag, size = 0x4, scoped, tag = 'scoped memory for tpu_custom_call.1']
    #allocation4 [shape = 's32[1]{0}', space=sflag, size = 0x4, scoped, tag = 'scoped memory for tpu_custom_call.1']
    #allocation5 [shape = 'u8[8192]{0}', space=vmem, size = 0x2000, scoped, tag = 'output window, operand 0, single buffered']
    %6 = vsyncpa [#allocation3], 0
    %7 = vsyncpa [#allocation4], 0
    // Predicated region
    $region2: #{tpu_custom_call.1} parent=1 // pred_check
      _
    $region3: #{tpu_custom_call.1} parent=1 // pred_check_branch
      %9 = sbr.rel (0) target = $region5
    $region4: #{tpu_custom_call.1} parent=1 // pred_region
      %11 = vsyncadd [#allocation3], 0
      %s13 = sshll.u32 %s0, 4
      %s14 = int_to_ptr.hbm [resolvable:$true] %s13
      %s15 = sshll.u32 [#allocation2], 4
      %s16 = int_to_ptr.vmem [resolvable:$true] %s15
      %18 = dma.hbm_to_vmem [thread:$0]  %s14, 256, %s16, [#allocation3]
    $region5: #{tpu_custom_call.1} parent=1 // pred_fallthru
      _
    // Predicated region
    $region6: #{tpu_custom_call.1} parent=1 // pred_check
      _
    $region7: #{tpu_custom_call.1} parent=1 // pred_check_branch
      %20 = sbr.rel (0) target = $region9
    $region8: #{tpu_custom_call.1} parent=1 // pred_region
      %22 = dma.done [#allocation3], 256
    $region9: #{tpu_custom_call.1} parent=1 // pred_fallthru
      _
    %v23 = vld [vmem:[#allocation2] sm:$0xff]
    %v24 = vld [vmem:[#allocation2 + $0x8] sm:$0xff]
    %25 = vst [vmem:[#allocation5] sm:$0xff] %v23
    %26 = vst [vmem:[#allocation5 + $0x8] sm:$0xff] %v24
    // Predicated region
    $region10: #{tpu_custom_call.1} parent=1 // pred_check
      _
    $region11: #{tpu_custom_call.1} parent=1 // pred_check_branch
      %28 = sbr.rel (0) target = $region13
    $region12: #{tpu_custom_call.1} parent=1 // pred_region
      %30 = vsyncadd [#allocation4], 0
      %s32 = sshll.u32 [#allocation5], 4
      %s33 = int_to_ptr.vmem [resolvable:$true] %s32
      %s34 = sshll.u32 %s1, 4
      %s35 = int_to_ptr.hbm [resolvable:$true] %s34
      %37 = dma.vmem_to_hbm [thread:$0]  %s33, 256, %s35, [#allocation4]
    $region13: #{tpu_custom_call.1} parent=1 // pred_fallthru
      _
    // Predicated region
    $region14: #{tpu_custom_call.1} parent=1 // pred_check
      _
    $region15: #{tpu_custom_call.1} parent=1 // pred_check_branch
      %39 = sbr.rel (0) target = $region17
    $region16: #{tpu_custom_call.1} parent=1 // pred_region
      %41 = dma.done [#allocation4], 256
    $region17: #{tpu_custom_call.1} parent=1 // pred_fallthru
      _
    %42 = vsyncpa [#allocation3], 1
    %43 = vsyncpa [#allocation4], 1

</llo_original>
